<compile_context>
chip_gen: v5e
topology: v5e:2x2
jax: 0.10.0
libtpu: 0.0.40
codegen_flags: <defaults>
</compile_context>

<pallas_src>
import functools

import jax
import jax.numpy as jnp
from jax.experimental import pallas as pl
from jax.experimental.pallas import tpu as pltpu

EPS = 1e-5                        # GroupNorm default eps (PyTorch)
_Z_TWO_PASS_DTYPE = jnp.bfloat16  # bf16 z halves the two-pass HBM round-trip


def _chip_budgets():
    """Per-generation VMEM budgets (v5e/v6e: 128 MiB physical; v7x: 64 MiB)."""
    vmem_phys = None
    try:
        info = pltpu.get_tpu_info()
        vmem_phys = getattr(info, "vmem_capacity_bytes", None)
    except Exception:
        vmem_phys = None
    if vmem_phys is None:
        vmem_phys = 64 * 1024 * 1024          # conservative (v7x-safe) default
    if vmem_phys >= 100 * 1024 * 1024:        # v5e / v6e
        return dict(vmem_limit=64 << 20, fused_max=16 << 20,
                    resident_max=32 << 20, hw_target=4096)
    return dict(vmem_limit=32 << 20, fused_max=8 << 20,
                resident_max=16 << 20, hw_target=2048)


# ----------------------------------------------------------------------------
# Kernels
# ----------------------------------------------------------------------------
def _fused_kernel(x_ref, w_ref, b_ref, g_ref, bt_ref, o_ref):
    """Single-block path (small per-sample slab): conv + GN + ReLU at once.

    x_ref: (4C, HW) polyphase components [a;b;c;d]; w_ref: (out_ch, 4C)
    Haar-folded 1x1-conv weight.
    """
    z = jnp.dot(w_ref[...], x_ref[...], preferred_element_type=jnp.float32)
    z = z + b_ref[...]                                   # (out_ch, HW), f32

    cnt = z.shape[0] * z.shape[1]
    s = jnp.sum(z)
    ss = jnp.sum(z * z)
    mu = s / cnt
    var = jnp.maximum(ss / cnt - mu * mu, 0.0)
    rstd = jax.lax.rsqrt(var + EPS)

    scale = g_ref[...] * rstd                            # (out_ch, 1)
    shift = bt_ref[...] - mu * scale                     # (out_ch, 1)
    o_ref[...] = jnp.maximum(z * scale + shift, 0.0).astype(o_ref.dtype)


def _resident_kernel(x_ref, w_ref, b_ref, g_ref, bt_ref, o_ref,
                     z_scr, sum_scr, ssq_scr, *, count, tile, hw_valid,
                     need_mask):
    """Single-call tiled path: conv per HW tile into a resident VMEM z scratch,
    vector stats accumulation, normalize + ReLU into the output at the last
    tile.  grid = (N, HW_pad/T); HW axis last and 'arbitrary'.
    """
    t = pl.program_id(1)

    @pl.when(t == 0)
    def _():
        sum_scr[...] = jnp.zeros_like(sum_scr)
        ssq_scr[...] = jnp.zeros_like(ssq_scr)

    z = jnp.dot(w_ref[...], x_ref[...], preferred_element_type=jnp.float32)
    z = z + b_ref[...]                                   # (out_ch, T), f32

    col0 = pl.multiple_of(t * tile, 128)
    z_scr[:, pl.ds(col0, tile)] = z                      # keep z resident

    if need_mask:  # static: padding columns exist -> exclude from stats
        cols = col0 + jax.lax.broadcasted_iota(jnp.int32, (1, tile), 1)
        zm = z * (cols < hw_valid).astype(jnp.float32)
    else:
        zm = z
    sum_scr[...] += jnp.sum(zm, axis=0, keepdims=True)   # (1, T) accumulators
    ssq_scr[...] += jnp.sum(zm * z, axis=0, keepdims=True)

    @pl.when(t == pl.num_programs(1) - 1)
    def _():
        mu = jnp.sum(sum_scr[...], axis=1, keepdims=True) / count      # (1,1)
        ex2 = jnp.sum(ssq_scr[...], axis=1, keepdims=True) / count
        var = jnp.maximum(ex2 - mu * mu, 0.0)
        rstd = jax.lax.rsqrt(var + EPS)
        scale = g_ref[...] * rstd                        # (out_ch, 1)
        shift = bt_ref[...] - mu * scale                 # (out_ch, 1)
        o_ref[...] = jnp.maximum(z_scr[...] * scale + shift,
                                 0.0).astype(o_ref.dtype)


def _conv_stats_kernel(x_ref, w_ref, b_ref, z_ref, mu_ref, rstd_ref,
                       sum_scr, ssq_scr, *, count, tile, hw_valid, need_mask):
    """Two-pass fallback, pass 1: z (stored bf16) + vector stats accumulation."""
    t = pl.program_id(1)

    @pl.when(t == 0)
    def _():
        sum_scr[...] = jnp.zeros_like(sum_scr)
        ssq_scr[...] = jnp.zeros_like(ssq_scr)

    z = jnp.dot(w_ref[...], x_ref[...], preferred_element_type=jnp.float32)
    z = z + b_ref[...]                                   # (out_ch, T), f32
    z_ref[...] = z.astype(z_ref.dtype)                   # bf16 round-trip

    if need_mask:
        cols = t * tile + jax.lax.broadcasted_iota(jnp.int32, (1, tile), 1)
        zm = z * (cols < hw_valid).astype(jnp.float32)
    else:
        zm = z
    sum_scr[...] += jnp.sum(zm, axis=0, keepdims=True)
    ssq_scr[...] += jnp.sum(zm * z, axis=0, keepdims=True)

    @pl.when(t == pl.num_programs(1) - 1)
    def _():
        mu = jnp.sum(sum_scr[...], axis=1, keepdims=True) / count
        ex2 = jnp.sum(ssq_scr[...], axis=1, keepdims=True) / count
        var = jnp.maximum(ex2 - mu * mu, 0.0)
        mu_ref[...] = mu
        rstd_ref[...] = jax.lax.rsqrt(var + EPS)


def _norm_kernel(z_ref, mu_ref, rstd_ref, g_ref, bt_ref, o_ref):
    """Two-pass fallback, pass 2: y = relu((z - mu)*rstd*gamma + beta)."""
    scale = g_ref[...] * rstd_ref[...]                   # (out_ch, 1)
    shift = bt_ref[...] - mu_ref[...] * scale            # (out_ch, 1)
    z = z_ref[...].astype(jnp.float32)
    o_ref[...] = jnp.maximum(z * scale + shift, 0.0).astype(o_ref.dtype)


# ----------------------------------------------------------------------------
# Wrapper
# ----------------------------------------------------------------------------
def _fold_params(conv_w, conv_b, gn_w, gn_b, acts_dtype):
    """Fold the Haar DWT (subband order [LL, HL, LH, HH]) into the 1x1 conv."""
    out_ch = conv_w.shape[0]
    C = conv_w.shape[1] // 4
    w = conv_w.reshape(out_ch, 4, C).astype(jnp.float32)
    W1, W2, W3, W4 = w[:, 0], w[:, 1], w[:, 2], w[:, 3]
    A = 0.5 * (W1 + W2 + W3 + W4)    # multiplies a = x[2i,   2j  ]
    B = 0.5 * (W1 + W2 - W3 - W4)    # multiplies b = x[2i,   2j+1]
    Cm = 0.5 * (W1 - W2 + W3 - W4)   # multiplies c = x[2i+1, 2j  ]
    D = 0.5 * (W1 - W2 - W3 + W4)    # multiplies d = x[2i+1, 2j+1]
    w_folded = jnp.concatenate([A, B, Cm, D], axis=1).astype(acts_dtype)
    bconv = conv_b.reshape(out_ch, 1).astype(jnp.float32)
    gamma = gn_w.reshape(out_ch, 1).astype(jnp.float32)
    beta = gn_b.reshape(out_ch, 1).astype(jnp.float32)
    return w_folded, bconv, gamma, beta


def _polyphase_cat(x, acts_dtype):
    """(N,C,H,W) -> (N,4C,H/2*W/2) with channel layout [a;b;c;d].

    XLA fuses the four strided slices + concat + cast into one copy of |x|.
    """
    N, C, H, W = x.shape
    H2, W2 = H // 2, W // 2
    a = x[:, :, 0::2, 0::2]
    b = x[:, :, 0::2, 1::2]
    c = x[:, :, 1::2, 0::2]
    d = x[:, :, 1::2, 1::2]
    xcat = jnp.concatenate([a, b, c, d], axis=1)
    return xcat.reshape(N, 4 * C, H2 * W2).astype(acts_dtype)


def _pick_hw_tile(hw, target):
    """128-multiple lane tile <= target; prefer an exact divisor of hw."""
    t = max((target // 128) * 128, 128)
    hw_up = ((hw + 127) // 128) * 128
    if hw_up <= t:
        return hw_up
    for cand in range(t, 127, -128):
        if hw % cand == 0:
            return cand
    return t  # no divisor: pad hw up to a multiple of t


def down_wt_gn(x, conv_w, conv_b, gn_w, gn_b, *,
               acts_dtype=jnp.bfloat16, hw_tile=None, force_path=None):
    """x: (N, C, H, W). conv_w: (out_ch, 4C, 1, 1). Returns (N, out_ch, H/2, W/2)."""
    N, C, H, W = x.shape
    assert H % 2 == 0 and W % 2 == 0, (
        "Down_wt_GN Pallas kernel requires even H, W (Haar, mode='zero').")
    out_ch = conv_w.shape[0]
    assert conv_w.shape[1] == 4 * C
    H2, W2 = H // 2, W // 2
    HW = H2 * W2
    out_dtype = x.dtype

    budgets = _chip_budgets()
    xcat = _polyphase_cat(x, acts_dtype)
    w_folded, bconv, gamma, beta = _fold_params(conv_w, conv_b, gn_w, gn_b,
                                                acts_dtype)

    ab = jnp.dtype(acts_dtype).itemsize
    ob = jnp.dtype(out_dtype).itemsize

    # ----- path selection (counts double-buffered input AND output blocks) ---
    fused_bytes = HW * (2 * 4 * C * ab + 2 * out_ch * ob + 4 * out_ch) + 4096
    if force_path is not None:
        path = force_path
    elif fused_bytes <= budgets["fused_max"]:
        path = "fused"
    else:
        T0 = hw_tile if hw_tile is not None else _pick_hw_tile(
            HW, budgets["hw_target"])
        HW_pad0 = ((HW + T0 - 1) // T0) * T0
        resident_bytes = (out_ch * HW_pad0 * (4 + 2 * ob)
                          + 2 * 4 * C * T0 * ab + 8 * T0 + 4096)
        path = "resident" if resident_bytes <= budgets["resident_max"] \
            else "two_pass"
    assert path in ("fused", "resident", "two_pass"), path

    cparams_seq = pltpu.CompilerParams(
        dimension_semantics=("parallel", "arbitrary"),
        vmem_limit_bytes=budgets["vmem_limit"])

    # ---------------------------- fused path --------------------------------
    if path == "fused":
        out = pl.pallas_call(
            _fused_kernel,
            out_shape=jax.ShapeDtypeStruct((N, out_ch, HW), out_dtype),
            grid=(N,),
            in_specs=[
                pl.BlockSpec((None, 4 * C, HW), lambda n: (n, 0, 0)),
                pl.BlockSpec((out_ch, 4 * C), lambda n: (0, 0)),
                pl.BlockSpec((out_ch, 1), lambda n: (0, 0)),
                pl.BlockSpec((out_ch, 1), lambda n: (0, 0)),
                pl.BlockSpec((out_ch, 1), lambda n: (0, 0)),
            ],
            out_specs=pl.BlockSpec((None, out_ch, HW), lambda n: (n, 0, 0)),
            compiler_params=pltpu.CompilerParams(
                dimension_semantics=("parallel",),
                vmem_limit_bytes=budgets["vmem_limit"]),
        )(xcat, w_folded, bconv, gamma, beta)
        return out.reshape(N, out_ch, H2, W2)

    # -------------------- common tiled prep (resident / two-pass) -----------
    T = hw_tile if hw_tile is not None else _pick_hw_tile(
        HW, budgets["hw_target"])
    assert T % 128 == 0, "hw_tile must be a multiple of 128"
    HW_pad = ((HW + T - 1) // T) * T
    n_tiles = HW_pad // T
    need_mask = HW_pad != HW
    if need_mask:
        xcat = jnp.pad(xcat, ((0, 0), (0, 0), (0, HW_pad - HW)))
    count = float(out_ch * HW)

    # --------------------------- resident path ------------------------------
    if path == "resident":
        kern = functools.partial(_resident_kernel, count=count, tile=T,
                                 hw_valid=HW, need_mask=need_mask)
        out = pl.pallas_call(
            kern,
            out_shape=jax.ShapeDtypeStruct((N, out_ch, HW_pad), out_dtype),
            grid=(N, n_tiles),
            in_specs=[
                pl.BlockSpec((None, 4 * C, T), lambda n, t: (n, 0, t)),
                pl.BlockSpec((out_ch, 4 * C), lambda n, t: (0, 0)),
                pl.BlockSpec((out_ch, 1), lambda n, t: (0, 0)),
                pl.BlockSpec((out_ch, 1), lambda n, t: (0, 0)),
                pl.BlockSpec((out_ch, 1), lambda n, t: (0, 0)),
            ],
            out_specs=pl.BlockSpec((None, out_ch, HW_pad),
                                   lambda n, t: (n, 0, 0)),
            scratch_shapes=[pltpu.VMEM((out_ch, HW_pad), jnp.float32),
                            pltpu.VMEM((1, T), jnp.float32),
                            pltpu.VMEM((1, T), jnp.float32)],
            compiler_params=cparams_seq,
        )(xcat, w_folded, bconv, gamma, beta)
        return out[:, :, :HW].reshape(N, out_ch, H2, W2)

    # -------------------------- two-pass fallback ----------------------------
    conv_kernel = functools.partial(_conv_stats_kernel, count=count, tile=T,
                                    hw_valid=HW, need_mask=need_mask)
    z, mu, rstd = pl.pallas_call(
        conv_kernel,
        out_shape=(jax.ShapeDtypeStruct((N, out_ch, HW_pad), _Z_TWO_PASS_DTYPE),
                   jax.ShapeDtypeStruct((N, 1, 1), jnp.float32),
                   jax.ShapeDtypeStruct((N, 1, 1), jnp.float32)),
        grid=(N, n_tiles),
        in_specs=[
            pl.BlockSpec((None, 4 * C, T), lambda n, t: (n, 0, t)),
            pl.BlockSpec((out_ch, 4 * C), lambda n, t: (0, 0)),
            pl.BlockSpec((out_ch, 1), lambda n, t: (0, 0)),
        ],
        out_specs=(
            pl.BlockSpec((None, out_ch, T), lambda n, t: (n, 0, t)),
            pl.BlockSpec((None, 1, 1), lambda n, t: (n, 0, 0)),
            pl.BlockSpec((None, 1, 1), lambda n, t: (n, 0, 0)),
        ),
        scratch_shapes=[pltpu.VMEM((1, T), jnp.float32),
                        pltpu.VMEM((1, T), jnp.float32)],
        compiler_params=cparams_seq,
    )(xcat, w_folded, bconv)

    out = pl.pallas_call(
        _norm_kernel,
        out_shape=jax.ShapeDtypeStruct((N, out_ch, HW_pad), out_dtype),
        grid=(N, n_tiles),
        in_specs=[
            pl.BlockSpec((None, out_ch, T), lambda n, t: (n, 0, t)),
            pl.BlockSpec((None, 1, 1), lambda n, t: (n, 0, 0)),
            pl.BlockSpec((None, 1, 1), lambda n, t: (n, 0, 0)),
            pl.BlockSpec((out_ch, 1), lambda n, t: (0, 0)),
            pl.BlockSpec((out_ch, 1), lambda n, t: (0, 0)),
        ],
        out_specs=pl.BlockSpec((None, out_ch, T), lambda n, t: (n, 0, t)),
        compiler_params=pltpu.CompilerParams(
            dimension_semantics=("parallel", "parallel"),
            vmem_limit_bytes=budgets["vmem_limit"]),
    )(z, mu, rstd, gamma, beta)
    return out[:, :, :HW].reshape(N, out_ch, H2, W2)


# ----------------------------------------------------------------------------
# Pure-JAX reference of the PyTorch forward (Haar, J=1, mode='zero', even H/W)
# ----------------------------------------------------------------------------
def _ref_forward(x, conv_w, conv_b, gn_w, gn_b):
    a = x[:, :, 0::2, 0::2]
    b = x[:, :, 0::2, 1::2]
    c = x[:, :, 1::2, 0::2]
    d = x[:, :, 1::2, 1::2]
    ll = 0.5 * (a + b + c + d)
    s1 = 0.5 * (a + b - c - d)
    s2 = 0.5 * (a - b + c - d)
    s3 = 0.5 * (a - b - c + d)
    cat = jnp.concatenate([ll, s1, s2, s3], axis=1)
    w2 = conv_w.reshape(conv_w.shape[0], -1)
    z = jnp.einsum('oc,nchw->nohw', w2, cat) + conv_b[None, :, None, None]
    mu = z.mean(axis=(1, 2, 3), keepdims=True)
    var = ((z - mu) ** 2).mean(axis=(1, 2, 3), keepdims=True)
    zn = (z - mu) / jnp.sqrt(var + EPS)
    y = zn * gn_w[None, :, None, None] + gn_b[None, :, None, None]
    return jnp.maximum(y, 0.0)


if __name__ == "__main__":
    key = jax.random.PRNGKey(0)
    kx, kw, kb, kg, kbt, kx2, kx3 = jax.random.split(key, 7)

    N, in_ch, H, W = 2, 4, 16, 16
    out_ch = 8

    x = jax.random.normal(kx, (N, in_ch, H, W), dtype=jnp.float32)
    conv_w = jax.random.normal(kw, (out_ch, 4 * in_ch, 1, 1), dtype=jnp.float32) * 0.1
    conv_b = jax.random.normal(kb, (out_ch,), dtype=jnp.float32) * 0.1
    gn_w = 1.0 + 0.1 * jax.random.normal(kg, (out_ch,), dtype=jnp.float32)
    gn_b = 0.1 * jax.random.normal(kbt, (out_ch,), dtype=jnp.float32)

    fwd = jax.jit(down_wt_gn,
                  static_argnames=("acts_dtype", "hw_tile", "force_path"))

    # 1) tiny shape -> fused single-block path, f32, tight tolerance
    out = jax.block_until_ready(
        fwd(x, conv_w, conv_b, gn_w, gn_b, acts_dtype=jnp.float32))
    ref = _ref_forward(x, conv_w, conv_b, gn_w, gn_b)
    assert out.shape == (N, out_ch, H // 2, W // 2), out.shape
    assert jnp.allclose(out, ref, atol=1e-4, rtol=1e-4), "fused f32 mismatch"

    # 2) resident single-call tiled path (cross-tile GN stats, no z HBM trip)
    x2 = jax.random.normal(kx2, (N, in_ch, 32, 32), dtype=jnp.float32)
    ref2 = _ref_forward(x2, conv_w, conv_b, gn_w, gn_b)
    out2 = jax.block_until_ready(
        fwd(x2, conv_w, conv_b, gn_w, gn_b, acts_dtype=jnp.float32,
            force_path="resident", hw_tile=128))
    assert out2.shape == (N, out_ch, 16, 16), out2.shape
    assert jnp.allclose(out2, ref2, atol=1e-4, rtol=1e-4), "resident f32 mismatch"

    # 3) two-pass fallback with bf16 z round-trip (f32 acts / f32 stats)
    out3 = jax.block_until_ready(
        fwd(x2, conv_w, conv_b, gn_w, gn_b, acts_dtype=jnp.float32,
            force_path="two_pass", hw_tile=128))
    assert out3.shape == (N, out_ch, 16, 16), out3.shape
    assert jnp.allclose(out3, ref2, atol=5e-2, rtol=5e-2), "two-pass mismatch"

    # 4) HW not a multiple of 128 -> padding + masked GN stats (resident path)
    x3 = jax.random.normal(kx3, (1, in_ch, 20, 20), dtype=jnp.float32)
    ref4 = _ref_forward(x3, conv_w, conv_b, gn_w, gn_b)
    out4 = jax.block_until_ready(
        fwd(x3, conv_w, conv_b, gn_w, gn_b, acts_dtype=jnp.float32,
            force_path="resident"))
    assert out4.shape == (1, out_ch, 10, 10), out4.shape
    assert jnp.allclose(out4, ref4, atol=1e-4, rtol=1e-4), "padded mismatch"

    # 5) default bf16 activations (HBM-bound fast path); loose tolerance
    out5 = jax.block_until_ready(
        fwd(x2, conv_w, conv_b, gn_w, gn_b, acts_dtype=jnp.bfloat16))
    assert out5.shape == (N, out_ch, 16, 16), out5.shape
    assert jnp.allclose(out5.astype(jnp.float32), ref2, atol=1e-1, rtol=1e-1), \
        "bf16 mismatch"

    print("KERNEL_OK")
</pallas_src>

<mosaic_0001>
module attributes {stable_mosaic.version = 11 : i64} {
  func.func @_fused_kernel(%arg0: i32, %arg1: memref<1x16x64xf32, #tpu.memory_space<vmem>>, %arg2: memref<8x16xf32, #tpu.memory_space<vmem>>, %arg3: memref<8x1xf32, #tpu.memory_space<vmem>>, %arg4: memref<8x1xf32, #tpu.memory_space<vmem>>, %arg5: memref<8x1xf32, #tpu.memory_space<vmem>>, %arg6: memref<1x8x64xf32, #tpu.memory_space<vmem>>) attributes {dimension_semantics = [#tpu.dimension_semantics<parallel>], iteration_bounds = array<i64: 2>, scalar_prefetch = 0 : i64, scratch_operands = 0 : i64, tpu.core_type = #tpu.core_type<tc>, window_params = [{transform_indices = @transform_0, window_bounds = array<i64: 1, 16, 64>}, {pipeline_mode = #tpu.pipeline_mode<synchronous>, transform_indices = @transform_1, window_bounds = array<i64: 8, 16>}, {pipeline_mode = #tpu.pipeline_mode<synchronous>, transform_indices = @transform_2, window_bounds = array<i64: 8, 1>}, {pipeline_mode = #tpu.pipeline_mode<synchronous>, transform_indices = @transform_3, window_bounds = array<i64: 8, 1>}, {pipeline_mode = #tpu.pipeline_mode<synchronous>, transform_indices = @transform_4, window_bounds = array<i64: 8, 1>}, {transform_indices = @transform_5, window_bounds = array<i64: 1, 8, 64>}]} {
    %c0 = arith.constant 0 : index
    %c0_0 = arith.constant 0 : index
    %0 = vector.load %arg2[%c0, %c0_0] : memref<8x16xf32, #tpu.memory_space<vmem>>, vector<8x16xf32>
    %c0_1 = arith.constant 0 : index
    %c0_2 = arith.constant 0 : index
    %c0_3 = arith.constant 0 : index
    %1 = vector.load %arg1[%c0_1, %c0_2, %c0_3] : memref<1x16x64xf32, #tpu.memory_space<vmem>>, vector<1x16x64xf32>
    %2 = vector.shape_cast %1 : vector<1x16x64xf32> to vector<16x64xf32>
    %cst = arith.constant dense<0.000000e+00> : vector<8x64xf32>
    %3 = tpu.matmul %0, %2, %cst {dimension_numbers = #tpu.dot_dimension_numbers<[1], [0], [0], [1], [0, 0, 1, 1], [], []>} : vector<8x16xf32>, vector<16x64xf32>, vector<8x64xf32> -> vector<8x64xf32>
    %c0_4 = arith.constant 0 : index
    %c0_5 = arith.constant 0 : index
    %4 = vector.load %arg3[%c0_4, %c0_5] : memref<8x1xf32, #tpu.memory_space<vmem>>, vector<8x1xf32>
    %5 = vector.broadcast %4 : vector<8x1xf32> to vector<8x64xf32>
    %6 = arith.addf %3, %5 : vector<8x64xf32>
    %7 = vector.shape_cast %6 : vector<8x64xf32> to vector<1x8x64xf32>
    %cst_6 = arith.constant dense<0.000000e+00> : vector<1xf32>
    %8 = vector.multi_reduction <add>, %7, %cst_6 [1, 2] : vector<1x8x64xf32> to vector<1xf32>
    %9 = vector.shape_cast %8 : vector<1xf32> to vector<1x1x1xf32>
    %10 = vector.extract %9[0, 0, 0] : f32 from vector<1x1x1xf32>
    %11 = arith.mulf %6, %6 : vector<8x64xf32>
    %12 = vector.shape_cast %11 : vector<8x64xf32> to vector<1x8x64xf32>
    %cst_7 = arith.constant dense<0.000000e+00> : vector<1xf32>
    %13 = vector.multi_reduction <add>, %12, %cst_7 [1, 2] : vector<1x8x64xf32> to vector<1xf32>
    %14 = vector.shape_cast %13 : vector<1xf32> to vector<1x1x1xf32>
    %15 = vector.extract %14[0, 0, 0] : f32 from vector<1x1x1xf32>
    %cst_8 = arith.constant 5.120000e+02 : f32
    %16 = arith.divf %10, %cst_8 : f32
    %cst_9 = arith.constant 5.120000e+02 : f32
    %17 = arith.divf %15, %cst_9 : f32
    %18 = arith.mulf %16, %16 : f32
    %19 = arith.subf %17, %18 : f32
    %cst_10 = arith.constant 0.000000e+00 : f32
    %20 = arith.maximumf %19, %cst_10 : f32
    %cst_11 = arith.constant 9.99999974E-6 : f32
    %21 = arith.addf %20, %cst_11 : f32
    %22 = math.rsqrt %21 : f32
    %c0_12 = arith.constant 0 : index
    %c0_13 = arith.constant 0 : index
    %23 = vector.load %arg4[%c0_12, %c0_13] : memref<8x1xf32, #tpu.memory_space<vmem>>, vector<8x1xf32>
    %24 = vector.broadcast %22 : f32 to vector<8x1xf32>
    %25 = arith.mulf %23, %24 : vector<8x1xf32>
    %c0_14 = arith.constant 0 : index
    %c0_15 = arith.constant 0 : index
    %26 = vector.load %arg5[%c0_14, %c0_15] : memref<8x1xf32, #tpu.memory_space<vmem>>, vector<8x1xf32>
    %27 = vector.broadcast %16 : f32 to vector<8x1xf32>
    %28 = arith.mulf %27, %25 : vector<8x1xf32>
    %29 = arith.subf %26, %28 : vector<8x1xf32>
    %30 = vector.broadcast %25 : vector<8x1xf32> to vector<8x64xf32>
    %31 = arith.mulf %6, %30 : vector<8x64xf32>
    %32 = vector.broadcast %29 : vector<8x1xf32> to vector<8x64xf32>
    %33 = arith.addf %31, %32 : vector<8x64xf32>
    %cst_16 = arith.constant 0.000000e+00 : f32
    %34 = vector.broadcast %cst_16 : f32 to vector<8x64xf32>
    %35 = arith.maximumf %33, %34 : vector<8x64xf32>
    %c0_17 = arith.constant 0 : index
    %c0_18 = arith.constant 0 : index
    %c0_19 = arith.constant 0 : index
    %36 = vector.load %arg6[%c0_17, %c0_18, %c0_19] : memref<1x8x64xf32, #tpu.memory_space<vmem>>, vector<1x8x64xf32>
    %37 = vector.shape_cast %36 : vector<1x8x64xf32> to vector<8x64xf32>
    %38 = vector.shape_cast %35 : vector<8x64xf32> to vector<1x8x64xf32>
    tpu.vector_store %arg6[%c0_17, %c0_18, %c0_19], %38 {strides = array<i32>} : memref<1x8x64xf32, #tpu.memory_space<vmem>>, vector<1x8x64xf32>,
    return
  }
  func.func @transform_0(%arg0: i32) -> (i32, i32, i32) {
    %c0_i32 = arith.constant 0 : i32
    %c0_i32_0 = arith.constant 0 : i32
    %c0_i32_1 = arith.constant 0 : i32
    return %arg0, %c0_i32, %c0_i32_0 : i32, i32, i32
  }
  func.func @transform_1(%arg0: i32) -> (i32, i32) {
    %c0_i32 = arith.constant 0 : i32
    %c0_i32_0 = arith.constant 0 : i32
    %c0_i32_1 = arith.constant 0 : i32
    return %c0_i32, %c0_i32_0 : i32, i32
  }
  func.func @transform_2(%arg0: i32) -> (i32, i32) {
    %c0_i32 = arith.constant 0 : i32
    %c0_i32_0 = arith.constant 0 : i32
    %c0_i32_1 = arith.constant 0 : i32
    return %c0_i32, %c0_i32_0 : i32, i32
  }
  func.func @transform_3(%arg0: i32) -> (i32, i32) {
    %c0_i32 = arith.constant 0 : i32
    %c0_i32_0 = arith.constant 0 : i32
    %c0_i32_1 = arith.constant 0 : i32
    return %c0_i32, %c0_i32_0 : i32, i32
  }
  func.func @transform_4(%arg0: i32) -> (i32, i32) {
    %c0_i32 = arith.constant 0 : i32
    %c0_i32_0 = arith.constant 0 : i32
    %c0_i32_1 = arith.constant 0 : i32
    return %c0_i32, %c0_i32_0 : i32, i32
  }
  func.func @transform_5(%arg0: i32) -> (i32, i32, i32) {
    %c0_i32 = arith.constant 0 : i32
    %c0_i32_0 = arith.constant 0 : i32
    %c0_i32_1 = arith.constant 0 : i32
    return %arg0, %c0_i32, %c0_i32_0 : i32, i32, i32
  }
}

</mosaic_0001>

<llo_original>
// kernel: down_wt_gn.1
$region0: #{down_wt_gn.1}
  #allocation0 [shape = 'u32[]', space=smem, size = 0x4, offset = 0x4, fixed_abs, tag = 'smem constant byte address 0x4 - core index']
  #allocation1 [shape = 'u32[72,128]{1,0:T(1,128)}', space=vmem, size = 0x9000, scoped, tag = 'internal scratch']
  %s0 = inlined_call_operand.vmem [shape: f32[2,16,64], index: 0, kind: input, shape index: {}]
  %s1 = inlined_call_operand.vmem [shape: f32[8,16], index: 1, kind: input, shape index: {}]
  %s2 = inlined_call_operand.vmem [shape: f32[8,1], index: 2, kind: input, shape index: {}]
  %s3 = inlined_call_operand.vmem [shape: f32[8,1], index: 3, kind: input, shape index: {}]
  %s4 = inlined_call_operand.vmem [shape: f32[8,1], index: 4, kind: input, shape index: {}]
  %s5 = inlined_call_operand.vmem [shape: f32[2,8,64], index: 5, kind: output, shape index: {}]
  %s6 = sld [smem:[#allocation0]]
  $region53: #{down_wt_gn.1} parent=0
    _
  %s8 = ssub.s32 1, %s6
  %s9 = scalar_select 0, %s8, %s6
  loop: start=0, step=1, limit=4
  $region2: #{down_wt_gn.1} parent=0 // loop_pre_header
    _
  $region3: #{down_wt_gn.1} parent=0 // loop_header
    %s11 = sphi 0, %s15
    %p12 = scmp.ge.s32.totalorder %s11, 4
    %s21 = sphi 0, %s23
    %s24 = sphi 0, %s21
    %s25 = sphi 0, %s24
    %s41 = sphi 0, %s25
    %s45 = sphi 0, %s45
    %s47 = sphi 0, %s45
    %s48 = sphi 0, %s47
    %s62 = sphi 0, %s48
    %s66 = sphi 0, %s66
    %s68 = sphi 0, %s66
    %s69 = sphi 0, %s68
    %s83 = sphi 0, %s69
    %s87 = sphi 0, %s87
    %s89 = sphi 0, %s87
    %s90 = sphi 0, %s89
    %s104 = sphi 0, %s90
    %s108 = sphi 0, %s108
    %s110 = sphi 0, %s108
    %s111 = sphi 0, %s110
    %s125 = sphi 0, %s111
    %s131 = sphi 0, %s133
    %s134 = sphi 0, %s131
    %s135 = sphi 0, %s134
    %s151 = sphi 0, %s135
  $region4: #{down_wt_gn.1} parent=0 // loop_header_branch
    %14 = sbr.rel (%p12) target = $region8
  $region5: #{down_wt_gn.1} parent=0 // loop_body
    %s16 = ssub.s32 %s11, 1
    %s17 = ssub.s32 %s11, 2
    %s18 = sadd.s32 %s11, 1
    %s19 = ssub.s32 %s11, %s18
    %p20 = scmp.eq.s32.totalorder %s19, 0
    %s22 = sadd.s32 %s21, 1
    %s23 = scalar_select %p20, %s21, %s22
    %p26 = pneg %p20
    %p27 = scmp.eq.s32.totalorder %s11, 1
    %p28 = por %p26, %p27
    %p29 = scmp.ne.s32.totalorder %s21, %s24
    %p30 = scmp.eq.s32.totalorder %s11, 0
    %p31 = por %p29, %p30
    %p32 = scmp.ne.s32.totalorder %s21, %s24
    %p33 = scmp.eq.s32.totalorder %s16, 1
    %p34 = por %p32, %p33
    %p35 = scmp.ne.s32.totalorder %s24, %s25
    %p36 = scmp.eq.s32.totalorder %s16, 0
    %p37 = por %p35, %p36
    %p38 = scmp.ne.s32.totalorder %s24, %s25
    %p39 = scmp.eq.s32.totalorder %s17, 1
    %p40 = por %p38, %p39
    %p42 = scmp.ne.s32.totalorder %s25, %s41
    %p43 = scmp.eq.s32.totalorder %s17, 0
    %p44 = por %p42, %p43
    %s46 = sadd.s32 %s45, 1
    %p49 = scmp.eq.s32.totalorder %s11, 1
    %p50 = scmp.ne.s32.totalorder %s45, %s47
    %p51 = scmp.eq.s32.totalorder %s11, 0
    %p52 = por %p50, %p51
    %p53 = scmp.ne.s32.totalorder %s45, %s47
    %p54 = scmp.eq.s32.totalorder %s16, 1
    %p55 = por %p53, %p54
    %p56 = scmp.ne.s32.totalorder %s47, %s48
    %p57 = scmp.eq.s32.totalorder %s16, 0
    %p58 = por %p56, %p57
    %p59 = scmp.ne.s32.totalorder %s47, %s48
    %p60 = scmp.eq.s32.totalorder %s17, 1
    %p61 = por %p59, %p60
    %p63 = scmp.ne.s32.totalorder %s48, %s62
    %p64 = scmp.eq.s32.totalorder %s17, 0
    %p65 = por %p63, %p64
    %s67 = sadd.s32 %s66, 1
    %p70 = scmp.eq.s32.totalorder %s11, 1
    %p71 = scmp.ne.s32.totalorder %s66, %s68
    %p72 = scmp.eq.s32.totalorder %s11, 0
    %p73 = por %p71, %p72
    %p74 = scmp.ne.s32.totalorder %s66, %s68
    %p75 = scmp.eq.s32.totalorder %s16, 1
    %p76 = por %p74, %p75
    %p77 = scmp.ne.s32.totalorder %s68, %s69
    %p78 = scmp.eq.s32.totalorder %s16, 0
    %p79 = por %p77, %p78
    %p80 = scmp.ne.s32.totalorder %s68, %s69
    %p81 = scmp.eq.s32.totalorder %s17, 1
    %p82 = por %p80, %p81
    %p84 = scmp.ne.s32.totalorder %s69, %s83
    %p85 = scmp.eq.s32.totalorder %s17, 0
    %p86 = por %p84, %p85
    %s88 = sadd.s32 %s87, 1
    %p91 = scmp.eq.s32.totalorder %s11, 1
    %p92 = scmp.ne.s32.totalorder %s87, %s89
    %p93 = scmp.eq.s32.totalorder %s11, 0
    %p94 = por %p92, %p93
    %p95 = scmp.ne.s32.totalorder %s87, %s89
    %p96 = scmp.eq.s32.totalorder %s16, 1
    %p97 = por %p95, %p96
    %p98 = scmp.ne.s32.totalorder %s89, %s90
    %p99 = scmp.eq.s32.totalorder %s16, 0
    %p100 = por %p98, %p99
    %p101 = scmp.ne.s32.totalorder %s89, %s90
    %p102 = scmp.eq.s32.totalorder %s17, 1
    %p103 = por %p101, %p102
    %p105 = scmp.ne.s32.totalorder %s90, %s104
    %p106 = scmp.eq.s32.totalorder %s17, 0
    %p107 = por %p105, %p106
    %s109 = sadd.s32 %s108, 1
    %p112 = scmp.eq.s32.totalorder %s11, 1
    %p113 = scmp.ne.s32.totalorder %s108, %s110
    %p114 = scmp.eq.s32.totalorder %s11, 0
    %p115 = por %p113, %p114
    %p116 = scmp.ne.s32.totalorder %s108, %s110
    %p117 = scmp.eq.s32.totalorder %s16, 1
    %p118 = por %p116, %p117
    %p119 = scmp.ne.s32.totalorder %s110, %s111
    %p120 = scmp.eq.s32.totalorder %s16, 0
    %p121 = por %p119, %p120
    %p122 = scmp.ne.s32.totalorder %s110, %s111
    %p123 = scmp.eq.s32.totalorder %s17, 1
    %p124 = por %p122, %p123
    %p126 = scmp.ne.s32.totalorder %s111, %s125
    %p127 = scmp.eq.s32.totalorder %s17, 0
    %p128 = por %p126, %p127
    %s129 = ssub.s32 %s11, %s18
    %p130 = scmp.eq.s32.totalorder %s129, 0
    %s132 = sadd.s32 %s131, 1
    %s133 = scalar_select %p130, %s131, %s132
    %p136 = pneg %p130
    %p137 = scmp.eq.s32.totalorder %s11, 1
    %p138 = por %p136, %p137
    %p139 = scmp.ne.s32.totalorder %s131, %s134
    %p140 = scmp.eq.s32.totalorder %s11, 0
    %p141 = por %p139, %p140
    %p142 = scmp.ne.s32.totalorder %s131, %s134
    %p143 = scmp.eq.s32.totalorder %s16, 1
    %p144 = por %p142, %p143
    %p145 = scmp.ne.s32.totalorder %s134, %s135
    %p146 = scmp.eq.s32.totalorder %s16, 0
    %p147 = por %p145, %p146
    %p148 = scmp.ne.s32.totalorder %s134, %s135
    %p149 = scmp.eq.s32.totalorder %s17, 1
    %p150 = por %p148, %p149
    %p152 = scmp.ne.s32.totalorder %s135, %s151
    %p153 = scmp.eq.s32.totalorder %s17, 0
    %p154 = por %p152, %p153
    %p155 = scmp.le.s32.totalorder 1, %s11
    %p156 = scmp.lt.s32.totalorder %s11, 3
    %p157 = pnand %p155, %p156
    %p158 = pneg %p157
    // Predicated region
    $region9: #{down_wt_gn.1} parent=5 // pred_check
      _
    $region10: #{down_wt_gn.1} parent=5 // pred_check_branch
      %160 = sbr.rel (%p157) target = $region12
    $region11: #{down_wt_gn.1} parent=5 // pred_region
      %s161 = ssub.s32 %s11, 1
      // Predicated region
      $region13: #{down_wt_gn.1} parent=11 // pred_check
        %p162 = pneg %p58
      $region14: #{down_wt_gn.1} parent=11 // pred_check_branch
        %164 = sbr.rel (%p162) target = $region16
      $region15: #{down_wt_gn.1} parent=11 // pred_region
        _
      $region16: #{down_wt_gn.1} parent=11 // pred_fallthru
        _
      // Predicated region
      $region17: #{down_wt_gn.1} parent=11 // pred_check
        %p165 = pneg %p79
      $region18: #{down_wt_gn.1} parent=11 // pred_check_branch
        %167 = sbr.rel (%p165) target = $region20
      $region19: #{down_wt_gn.1} parent=11 // pred_region
        _
      $region20: #{down_wt_gn.1} parent=11 // pred_fallthru
        _
      // Predicated region
      $region21: #{down_wt_gn.1} parent=11 // pred_check
        %p168 = pneg %p100
      $region22: #{down_wt_gn.1} parent=11 // pred_check_branch
        %170 = sbr.rel (%p168) target = $region24
      $region23: #{down_wt_gn.1} parent=11 // pred_region
        _
      $region24: #{down_wt_gn.1} parent=11 // pred_fallthru
        _
      // Predicated region
      $region25: #{down_wt_gn.1} parent=11 // pred_check
        %p171 = pneg %p121
      $region26: #{down_wt_gn.1} parent=11 // pred_check_branch
        %173 = sbr.rel (%p171) target = $region28
      $region27: #{down_wt_gn.1} parent=11 // pred_region
        _
      $region28: #{down_wt_gn.1} parent=11 // pred_fallthru
        _
    $region12: #{down_wt_gn.1} parent=5 // pred_fallthru
      _
    %p174 = scmp.lt.s32.totalorder %s11, 2
    // Predicated region
    $region29: #{down_wt_gn.1} parent=5 // pred_check
      %p175 = pneg %p174
    $region30: #{down_wt_gn.1} parent=5 // pred_check_branch
      %177 = sbr.rel (%p175) target = $region32
    $region31: #{down_wt_gn.1} parent=5 // pred_region
      // Predicated region
      $region33: #{down_wt_gn.1} parent=31 // pred_check
        %p178 = pneg %p31
      $region34: #{down_wt_gn.1} parent=31 // pred_check_branch
        %180 = sbr.rel (%p178) target = $region36
      $region35: #{down_wt_gn.1} parent=31 // pred_region
        %p181 = scmp.lt.s32.totalorder %s11, 1
        %s182 = scalar_select %p181, %s11, 1
        %s183 = smul.addr %s182, 2
        %s184 = smul.addr %s183, 8
        %s185 = scalar_lea.vmem %s0, %s184
      $region36: #{down_wt_gn.1} parent=31 // pred_fallthru
        _
    $region32: #{down_wt_gn.1} parent=5 // pred_fallthru
      _
    %p186 = scmp.le.s32.totalorder 1, %s11
    %p187 = scmp.lt.s32.totalorder %s11, 3
    %p188 = pnand %p186, %p187
    %p189 = pneg %p188
    // Predicated region
    $region37: #{down_wt_gn.1} parent=5 // pred_check
      _
    $region38: #{down_wt_gn.1} parent=5 // pred_check_branch
      %191 = sbr.rel (%p188) target = $region40
    $region39: #{down_wt_gn.1} parent=5 // pred_region
      %s192 = ssub.s32 %s11, 1
      %p193 = scmp.lt.s32.totalorder %s16, 1
      %s194 = scalar_select %p193, %s16, 1
      %s195 = smul.addr %s194, 2
      %s196 = smul.addr %s195, 8
      %s197 = scalar_lea.vmem %s0, %s196
      %p198 = pneg %p37
      %p199 = pneg %p34
      %p200 = pneg %p58
      %p201 = pneg %p55
      %p202 = pneg %p79
      %p203 = pneg %p76
      %p204 = pneg %p100
      %p205 = pneg %p97
      %p206 = pneg %p121
      %p207 = pneg %p118
      %p208 = pneg %p147
      %p209 = pneg %p144
      %p210 = scmp.lt.s32.totalorder %s16, 1
      %s211 = scalar_select %p210, %s16, 1
      %s212 = smul.addr %s211, 8
      %s213 = scalar_lea.vmem %s5, %s212
      %p214 = scmp.lt.s32.totalorder %s16, 1
      %s215 = scalar_select %p214, %s16, 1
      %s216 = smul.addr %s215, 2
      %s217 = smul.addr %s216, 8
      %s218 = scalar_lea.vmem %s0, %s217
      %p219 = scmp.lt.s32.totalorder %s16, 1
      %s220 = scalar_select %p219, %s16, 1
      %s221 = smul.addr %s220, 8
      %s222 = scalar_lea.vmem %s5, %s221
      %v223 = vld [vmem:[%s1] sm:$0xff]
      %v224 = vld [vmem:[%s218] sm:$0xff]
      %v225 = vld [vmem:[%s218 + $0x8] sm:$0xff]
      %v226 = vld [vmem:[%s2] sm:$0xff]
      %228 = vset.pattern.permute.xlu0 0
      %229 = vperm.xlu0 %228, %v226
      %v230 = vpop.permute.xlu0 %229
      %vm232 = vcmask 130048
      %v234 = vsel %vm232, %v223, 0
      %236 = vmatpush.msra.mxu0 0.0
      %237 = vmatpush.msra.mxu0 0.0
      %238 = vmatpush.msra.mxu0 0.0
      %239 = vmatpush.msra.mxu0 0.0
      %240 = vmatpush.msra.mxu0 0.0
      %241 = vmatpush.msra.mxu0 0.0
      %242 = vmatpush.msra.mxu0 0.0
      %243 = vmatpush.msra.mxu0 0.0
      %244 = vmatpush.msra.mxu0 0.0
      %245 = vmatpush.msra.mxu0 0.0
      %246 = vmatpush.msra.mxu0 0.0
      %247 = vmatpush.msra.mxu0 0.0
      %248 = vmatpush.msra.mxu0 0.0
      %249 = vmatpush.msra.mxu0 0.0
      %250 = vmatpush.msra.mxu0 %v225
      %251 = vmatpush.msra.mxu0 %v224
      %252 = vmatmul.f32.gmra.mxu0 %v234
      %v253 = vpop.f32.mrf.mxu0
      %v254 = vadd.f32 %v230, %v253
      %255 = vdwg.mxu0
      %vm256 = vcmask 523264
      %v257 = vsel %vm256, %v254, 0.0
      %258 = vadd.xlane.f32.xlu0 %v257
      %v259 = vpop.xlane.xlu0 %258
      %v260 = vrot.slane %v259, 4
      %v261 = vadd.f32 %v259, %v260
      %v262 = vrot.slane %v261, 2
      %v263 = vadd.f32 %v261, %v262
      %v264 = vrot.slane %v263, 1
      %v265 = vadd.f32 %v263, %v264
      %s266 = vtos %v265
      %v267 = vmul.f32 %v254, %v254
      %v268 = vsel %vm256, %v267, 0.0
      %269 = vadd.xlane.f32.xlu0 %v268
      %v270 = vpop.xlane.xlu0 %269
      %v271 = vrot.slane %v270, 4
      %v272 = vadd.f32 %v270, %v271
      %v273 = vrot.slane %v272, 2
      %v274 = vadd.f32 %v272, %v273
      %v275 = vrot.slane %v274, 1
      %v276 = vadd.f32 %v274, %v275
      %s277 = vtos %v276
      %v278 = vrcp.pop 512.0
      %v279 = vmul.f32 512.0, %v278
      %v280 = vsub.f32 1.0, %v279
      %v281 = vmul.f32 %v278, %v280
      %v282 = vadd.f32 %v278, %v281
      %vm283 = vweird.f32 %v278
      %v284 = vsel %vm283, %v278, %v282
      %s285 = vtos %v284
      %s286 = smul.f32 %s266, %s285
      %v287 = vrcp.pop 512.0
      %v288 = vmul.f32 512.0, %v287
      %v289 = vsub.f32 1.0, %v288
      %v290 = vmul.f32 %v287, %v289
      %v291 = vadd.f32 %v287, %v290
      %vm292 = vweird.f32 %v287
      %v293 = vsel %vm292, %v287, %v291
      %s294 = vtos %v293
      %s295 = smul.f32 %s277, %s294
      %s296 = smul.f32 %s286, %s286
      %s297 = ssub.f32 %s295, %s296
      %s298 = smax.f32 %s297, 0.0
      %s299 = sadd.f32 %s298, 1e-05
      %v300 = vstv %s299
      %v301 = vrsqrt.pop %v300
      %v302 = vmul.f32 %v301, %v300
      %v303 = vmul.f32 %v302, %v301
      %v304 = vmul.f32 0.5, %v303
      %v305 = vsub.f32 1.5, %v304
      %v306 = vmul.f32 %v301, %v305
      %vm307 = vweird.f32 %v300
      %vm308 = vweird.f32 %v301
      %vm309 = vmor %vm307, %vm308
      %v310 = vsel %vm309, %v301, %v306
      %s311 = vtos %v310
      %v312 = vld [vmem:[%s3] sm:$0xff]
      %v313 = vstv %s311
      %v314 = vmul.f32 %v312, %v313
      %v315 = vld [vmem:[%s4] sm:$0xff]
      %v316 = vstv %s286
      %v317 = vmul.f32 %v316, %v314
      %v318 = vsub.f32 %v315, %v317
      %320 = vset.pattern.permute.xlu0 0
      %321 = vperm.xlu0 %320, %v314
      %v322 = vpop.permute.xlu0 %321
      %v324 = vmul.f32 %v254, %v322
      %326 = vset.pattern.permute.xlu0 0
      %327 = vperm.xlu0 %326, %v318
      %v328 = vpop.permute.xlu0 %327
      %v330 = vadd.f32 %v324, %v328
      %v331 = vmax.f32 %v330, 0.0
      %332 = vst.msk [vmem:[%s222] sm:$0xff] %vm256, %v331
      %p333 = scmp.lt.s32.totalorder %s16, 1
      %s334 = scalar_select %p333, %s16, 1
      %s335 = smul.addr %s334, 8
      %s336 = scalar_lea.vmem %s5, %s335
      // Predicated region
      $region41: #{down_wt_gn.1} parent=39 // pred_check
        %p337 = pneg %p144
      $region42: #{down_wt_gn.1} parent=39 // pred_check_branch
        %339 = sbr.rel (%p337) target = $region44
      $region43: #{down_wt_gn.1} parent=39 // pred_region
        _
      $region44: #{down_wt_gn.1} parent=39 // pred_fallthru
        _
    $region40: #{down_wt_gn.1} parent=5 // pred_fallthru
      _
    %p340 = scmp.le.s32.totalorder 2, %s11
    // Predicated region
    $region45: #{down_wt_gn.1} parent=5 // pred_check
      %p341 = pneg %p340
    $region46: #{down_wt_gn.1} parent=5 // pred_check_branch
      %343 = sbr.rel (%p341) target = $region48
    $region47: #{down_wt_gn.1} parent=5 // pred_region
      %s344 = ssub.s32 %s11, 2
      // Predicated region
      $region49: #{down_wt_gn.1} parent=47 // pred_check
        %p345 = pneg %p150
      $region50: #{down_wt_gn.1} parent=47 // pred_check_branch
        %347 = sbr.rel (%p345) target = $region52
      $region51: #{down_wt_gn.1} parent=47 // pred_region
        %p348 = scmp.lt.s32.totalorder %s17, 1
        %s349 = scalar_select %p348, %s17, 1
        %s350 = smul.addr %s349, 8
        %s351 = scalar_lea.vmem %s5, %s350
      $region52: #{down_wt_gn.1} parent=47 // pred_fallthru
        _
    $region48: #{down_wt_gn.1} parent=5 // pred_fallthru
      _
  $region6: #{down_wt_gn.1} parent=0 // loop_footer
    %s15 = sadd.s32 1, %s11
  $region7: #{down_wt_gn.1} parent=0 // loop_footer_branch
    %10 = sbr.rel target = $region3
  $region8: #{down_wt_gn.1} parent=0 // loop_exit
    _

</llo_original>
